<compile_context>
chip_gen: v7x
topology: tpu7x:2x2x1
jax: 0.10.0
libtpu: 0.0.40
codegen_flags: <defaults>
</compile_context>

<pallas_src>
import math
import jax
import jax.numpy as jnp
from jax.experimental import pallas as pl
from jax.experimental.pallas import tpu as pltpu


def _round_up(n: int, m: int) -> int:
    return ((n + m - 1) // m) * m


def mlp_kernel(x_ref, w1_ref, b1_ref, w2_ref, b2_ref, o_ref):
    # x_ref : (3, TILE_B)   w1_ref: (H, 3)   b1_ref: (H, 1)
    # w2_ref: (H, 1)        b2_ref: (1, 1) in SMEM      o_ref: (1, TILE_B)
    x = x_ref[...]
    w1 = w1_ref[...]

    # hidden = w1 @ x + b1  -> (H, TILE_B), done as a 3-term VPU broadcast-MAC
    # (K=3 would waste >97% of the MXU contraction width).
    h = (w1[:, 0:1] * x[0:1, :]
         + w1[:, 1:2] * x[1:2, :]
         + w1[:, 2:3] * x[2:3, :]
         + b1_ref[...])

    # sigmoid(h) = 0.5 * tanh(0.5*h) + 0.5  -- tanh goes to the EUP slot,
    # no full-precision VPU divide sequence.
    a = 0.5 * jnp.tanh(0.5 * h) + 0.5

    # output = w2^T @ a + b2 -> (1, TILE_B): VPU multiply + sublane reduce (XLU),
    # instead of an N=1 MXU matmul. Result is lane-dense.
    out = jnp.sum(a * w2_ref[...], axis=0, keepdims=True) + b2_ref[0, 0]
    o_ref[...] = out.astype(o_ref.dtype)


def mlp_forward(x, w1, b1, w2, b2, *, tile_b=512):
    """x: (B, 3) f32; w1: (3, H); b1: (1, H); w2: (H, 1); b2: (1, 1). Returns (B, 1)."""
    B = x.shape[0]
    H = w1.shape[1]

    # Batch tile (lane axis). Keep it a multiple of 128, cap at the padded batch.
    tile_b = max(128, min(tile_b, _round_up(B, 128)))
    b_pad = _round_up(B, tile_b)

    # Transposed, lane-dense layout: batch on the lane axis everywhere.
    xt = jnp.pad(x.T, ((0, 0), (0, b_pad - B)))          # (3, B_pad)
    w1t = w1.T                                           # (H, 3)
    b1c = b1.reshape(H, 1)                               # (H, 1)
    w2c = w2.reshape(H, 1)                               # (H, 1)
    b2s = b2.reshape(1, 1).astype(jnp.float32)           # (1, 1) scalar -> SMEM

    grid = (b_pad // tile_b,)

    out = pl.pallas_call(
        mlp_kernel,
        out_shape=jax.ShapeDtypeStruct((1, b_pad), jnp.float32),
        grid_spec=pltpu.PrefetchScalarGridSpec(
            num_scalar_prefetch=0,
            grid=grid,
            in_specs=[
                # batch tile marches along the lane axis
                pl.BlockSpec((3, tile_b), lambda i: (0, i)),
                # grid-invariant weights: constant block index -> stay resident
                pl.BlockSpec((H, 3), lambda i: (0, 0)),
                pl.BlockSpec((H, 1), lambda i: (0, 0)),
                pl.BlockSpec((H, 1), lambda i: (0, 0)),
                # scalar bias in SMEM
                pl.BlockSpec((1, 1), lambda i: (0, 0),
                             memory_space=pltpu.MemorySpace.SMEM),
            ],
            out_specs=pl.BlockSpec((1, tile_b), lambda i: (0, i)),
        ),
        compiler_params=pltpu.CompilerParams(
            # batch tiles are independent -> shard across v7x's 2 TensorCores
            dimension_semantics=("parallel",),
        ),
    )(xt, w1t, b1c, w2c, b2s)

    return out[0, :B].reshape(B, 1)


def init_params(key, hidden_size):
    # Mirror torch.nn.Linear default init: U(-1/sqrt(fan_in), 1/sqrt(fan_in))
    k1, k2, k3, k4 = jax.random.split(key, 4)
    bound1 = 1.0 / math.sqrt(3.0)
    w1 = jax.random.uniform(k1, (3, hidden_size), jnp.float32, -bound1, bound1)
    b1 = jax.random.uniform(k2, (1, hidden_size), jnp.float32, -bound1, bound1)
    bound2 = 1.0 / math.sqrt(hidden_size)
    w2 = jax.random.uniform(k3, (hidden_size, 1), jnp.float32, -bound2, bound2)
    b2 = jax.random.uniform(k4, (1, 1), jnp.float32, -bound2, bound2)
    return w1, b1, w2, b2


if __name__ == "__main__":
    key = jax.random.PRNGKey(0)
    kx, kp = jax.random.split(key)

    batch = 1024          # 2 grid steps of 512 lanes each
    hidden_size = 32

    x = jax.random.normal(kx, (batch, 3), jnp.float32)
    w1, b1, w2, b2 = init_params(kp, hidden_size)

    out = mlp_forward(x, w1, b1, w2, b2, tile_b=512)
    out = jax.block_until_ready(out)

    # Pure-JAX reference check (full-precision dots).
    h_ref = jnp.dot(x, w1, precision=jax.lax.Precision.HIGHEST) + b1
    ref = jnp.dot(jax.nn.sigmoid(h_ref), w2,
                  precision=jax.lax.Precision.HIGHEST) + b2
    assert out.shape == (batch, 1)
    assert jnp.allclose(out, ref, atol=1e-4, rtol=1e-4), float(
        jnp.max(jnp.abs(out - ref)))

    print("KERNEL_OK")
</pallas_src>

<mosaic_0001>
module attributes {stable_mosaic.version = 11 : i64} {
  func.func @mlp_kernel(%arg0: i32, %arg1: memref<3x512xf32, #tpu.memory_space<vmem>>, %arg2: memref<32x3xf32, #tpu.memory_space<vmem>>, %arg3: memref<32x1xf32, #tpu.memory_space<vmem>>, %arg4: memref<32x1xf32, #tpu.memory_space<vmem>>, %arg5: memref<1x1xf32, #tpu.memory_space<smem>>, %arg6: memref<1x512xf32, #tpu.memory_space<vmem>>) attributes {dimension_semantics = [#tpu.dimension_semantics<parallel>], iteration_bounds = array<i64: 2>, scalar_prefetch = 0 : i64, scratch_operands = 0 : i64, tpu.core_type = #tpu.core_type<tc>, window_params = [{transform_indices = @transform_0, window_bounds = array<i64: 3, 512>}, {pipeline_mode = #tpu.pipeline_mode<synchronous>, transform_indices = @transform_1, window_bounds = array<i64: 32, 3>}, {pipeline_mode = #tpu.pipeline_mode<synchronous>, transform_indices = @transform_2, window_bounds = array<i64: 32, 1>}, {pipeline_mode = #tpu.pipeline_mode<synchronous>, transform_indices = @transform_3, window_bounds = array<i64: 32, 1>}, {transform_indices = @transform_4, window_bounds = array<i64: 1, 1>}, {transform_indices = @transform_5, window_bounds = array<i64: 1, 512>}]} {
    %c0 = arith.constant 0 : index
    %c0_0 = arith.constant 0 : index
    %0 = vector.load %arg1[%c0, %c0_0] : memref<3x512xf32, #tpu.memory_space<vmem>>, vector<3x512xf32>
    %c0_1 = arith.constant 0 : index
    %c0_2 = arith.constant 0 : index
    %1 = vector.load %arg2[%c0_1, %c0_2] : memref<32x3xf32, #tpu.memory_space<vmem>>, vector<32x3xf32>
    %2 = vector.extract_strided_slice %1 {offsets = [0, 0], sizes = [32, 1], strides = [1, 1]} : vector<32x3xf32> to vector<32x1xf32>
    %3 = vector.extract_strided_slice %0 {offsets = [0, 0], sizes = [1, 512], strides = [1, 1]} : vector<3x512xf32> to vector<1x512xf32>
    %4 = vector.broadcast %2 : vector<32x1xf32> to vector<32x512xf32>
    %5 = vector.broadcast %3 : vector<1x512xf32> to vector<32x512xf32>
    %6 = arith.mulf %4, %5 : vector<32x512xf32>
    %7 = vector.extract_strided_slice %1 {offsets = [0, 1], sizes = [32, 1], strides = [1, 1]} : vector<32x3xf32> to vector<32x1xf32>
    %8 = vector.extract_strided_slice %0 {offsets = [1, 0], sizes = [1, 512], strides = [1, 1]} : vector<3x512xf32> to vector<1x512xf32>
    %9 = vector.broadcast %7 : vector<32x1xf32> to vector<32x512xf32>
    %10 = vector.broadcast %8 : vector<1x512xf32> to vector<32x512xf32>
    %11 = arith.mulf %9, %10 : vector<32x512xf32>
    %12 = arith.addf %6, %11 : vector<32x512xf32>
    %13 = vector.extract_strided_slice %1 {offsets = [0, 2], sizes = [32, 1], strides = [1, 1]} : vector<32x3xf32> to vector<32x1xf32>
    %14 = vector.extract_strided_slice %0 {offsets = [2, 0], sizes = [1, 512], strides = [1, 1]} : vector<3x512xf32> to vector<1x512xf32>
    %15 = vector.broadcast %13 : vector<32x1xf32> to vector<32x512xf32>
    %16 = vector.broadcast %14 : vector<1x512xf32> to vector<32x512xf32>
    %17 = arith.mulf %15, %16 : vector<32x512xf32>
    %18 = arith.addf %12, %17 : vector<32x512xf32>
    %c0_3 = arith.constant 0 : index
    %c0_4 = arith.constant 0 : index
    %19 = vector.load %arg3[%c0_3, %c0_4] : memref<32x1xf32, #tpu.memory_space<vmem>>, vector<32x1xf32>
    %20 = vector.broadcast %19 : vector<32x1xf32> to vector<32x512xf32>
    %21 = arith.addf %18, %20 : vector<32x512xf32>
    %cst = arith.constant 5.000000e-01 : f32
    %22 = vector.broadcast %cst : f32 to vector<32x512xf32>
    %23 = arith.mulf %22, %21 : vector<32x512xf32>
    %24 = math.tanh %23 : vector<32x512xf32>
    %cst_5 = arith.constant 5.000000e-01 : f32
    %25 = vector.broadcast %cst_5 : f32 to vector<32x512xf32>
    %26 = arith.mulf %25, %24 : vector<32x512xf32>
    %cst_6 = arith.constant 5.000000e-01 : f32
    %27 = vector.broadcast %cst_6 : f32 to vector<32x512xf32>
    %28 = arith.addf %26, %27 : vector<32x512xf32>
    %c0_7 = arith.constant 0 : index
    %c0_8 = arith.constant 0 : index
    %29 = vector.load %arg4[%c0_7, %c0_8] : memref<32x1xf32, #tpu.memory_space<vmem>>, vector<32x1xf32>
    %30 = vector.broadcast %29 : vector<32x1xf32> to vector<32x512xf32>
    %31 = arith.mulf %28, %30 : vector<32x512xf32>
    %cst_9 = arith.constant dense<0.000000e+00> : vector<512xf32>
    %32 = vector.multi_reduction <add>, %31, %cst_9 [0] : vector<32x512xf32> to vector<512xf32>
    %33 = vector.shape_cast %32 : vector<512xf32> to vector<1x512xf32>
    %c0_10 = arith.constant 0 : index
    %c0_11 = arith.constant 0 : index
    %34 = memref.load %arg5[%c0_10, %c0_11] : memref<1x1xf32, #tpu.memory_space<smem>>
    %35 = vector.broadcast %34 : f32 to vector<1x512xf32>
    %36 = arith.addf %33, %35 : vector<1x512xf32>
    %c0_12 = arith.constant 0 : index
    %c0_13 = arith.constant 0 : index
    %37 = vector.load %arg6[%c0_12, %c0_13] : memref<1x512xf32, #tpu.memory_space<vmem>>, vector<1x512xf32>
    tpu.vector_store %arg6[%c0_12, %c0_13], %36 {strides = array<i32>} : memref<1x512xf32, #tpu.memory_space<vmem>>, vector<1x512xf32>,
    return
  }
  func.func @transform_0(%arg0: i32) -> (i32, i32) {
    %c0_i32 = arith.constant 0 : i32
    %c0_i32_0 = arith.constant 0 : i32
    return %c0_i32, %arg0 : i32, i32
  }
  func.func @transform_1(%arg0: i32) -> (i32, i32) {
    %c0_i32 = arith.constant 0 : i32
    %c0_i32_0 = arith.constant 0 : i32
    %c0_i32_1 = arith.constant 0 : i32
    return %c0_i32, %c0_i32_0 : i32, i32
  }
  func.func @transform_2(%arg0: i32) -> (i32, i32) {
    %c0_i32 = arith.constant 0 : i32
    %c0_i32_0 = arith.constant 0 : i32
    %c0_i32_1 = arith.constant 0 : i32
    return %c0_i32, %c0_i32_0 : i32, i32
  }
  func.func @transform_3(%arg0: i32) -> (i32, i32) {
    %c0_i32 = arith.constant 0 : i32
    %c0_i32_0 = arith.constant 0 : i32
    %c0_i32_1 = arith.constant 0 : i32
    return %c0_i32, %c0_i32_0 : i32, i32
  }
  func.func @transform_4(%arg0: i32) -> (i32, i32) {
    %c0_i32 = arith.constant 0 : i32
    %c0_i32_0 = arith.constant 0 : i32
    %c0_i32_1 = arith.constant 0 : i32
    return %c0_i32, %c0_i32_0 : i32, i32
  }
  func.func @transform_5(%arg0: i32) -> (i32, i32) {
    %c0_i32 = arith.constant 0 : i32
    %c0_i32_0 = arith.constant 0 : i32
    return %c0_i32, %arg0 : i32, i32
  }
}

</mosaic_0001>

<llo_original>
// kernel: tpu_custom_call.1
$region0: #{tpu_custom_call.1}
  #allocation0 [shape = 'u32[]', space=smem, size = 0x4, offset = 0x4, fixed_abs, tag = 'smem constant byte address 0x4 - core index']
  #allocation1 [shape = 'u32[144,128]{1,0:T(1,128)}', space=vmem, size = 0x12000, scoped, tag = 'internal scratch']
  #allocation2 [shape = 'f32[1,1]{1,0:T(1,128)S(6)}', space=smem, size = 0x200, scoped, tag = 'scoped memory for tpu_custom_call.1']
  %s0 = inlined_call_operand.vmem [shape: f32[3,1024], index: 0, kind: input, shape index: {}]
  %s1 = inlined_call_operand.vmem [shape: f32[32,3], index: 1, kind: input, shape index: {}]
  %s2 = inlined_call_operand.vmem [shape: f32[32,1], index: 2, kind: input, shape index: {}]
  %s3 = inlined_call_operand.vmem [shape: f32[32,1], index: 3, kind: input, shape index: {}]
  %s4 = inlined_call_operand.<no memory space> [shape: f32[1,1], index: 4, kind: input, shape index: {}]
  %s5 = inlined_call_operand.hbm [shape: f32[1,1024], index: 5, kind: output, shape index: {}]
  %s6 = sld [smem:[#allocation0]]
  $region53: #{tpu_custom_call.1} parent=0
    _
  %s8 = ssub.s32 1, %s6
  %s9 = scalar_select 0, %s8, %s6
  %10 = sst [smem:[#allocation2]] %s4
  $region1: #{tpu_custom_call.1} parent=0
    #allocation3 [shape = 'u8[4096]{0}', space=vmem, size = 0x1000, scoped, tag = 'output window, operand 0']
    #allocation4 [shape = 's32[2]{0}', space=sflag, size = 0x8, scoped, tag = 'scoped memory for tpu_custom_call.1']
    %11 = vsyncpa [#allocation4], 0
    %s12 = scalar_lea.sflag [#allocation4], 1
    %13 = vsyncpa %s12, 0
    loop: start=0, step=1, limit=4
    $region2: #{tpu_custom_call.1} parent=1 // loop_pre_header
      _
    $region3: #{tpu_custom_call.1} parent=1 // loop_header
      %s15 = sphi 0, %s19
      %p16 = scmp.ge.s32.totalorder %s15, 4
      %s25 = sphi 0, %s27
      %s28 = sphi 0, %s25
      %s29 = sphi 0, %s28
      %s45 = sphi 0, %s29
      %s49 = sphi 0, %s49
      %s51 = sphi 0, %s49
      %s52 = sphi 0, %s51
      %s66 = sphi 0, %s52
      %s70 = sphi 0, %s70
      %s72 = sphi 0, %s70
      %s73 = sphi 0, %s72
      %s87 = sphi 0, %s73
      %s91 = sphi 0, %s91
      %s93 = sphi 0, %s91
      %s94 = sphi 0, %s93
      %s108 = sphi 0, %s94
      %s112 = sphi 0, %s112
      %s114 = sphi 0, %s112
      %s115 = sphi 0, %s114
      %s129 = sphi 0, %s115
      %s135 = sphi 0, %s137
      %s138 = sphi 0, %s135
      %s139 = sphi 0, %s138
      %s155 = sphi 0, %s139
    $region4: #{tpu_custom_call.1} parent=1 // loop_header_branch
      %18 = sbr.rel (%p16) target = $region8
    $region5: #{tpu_custom_call.1} parent=1 // loop_body
      %s20 = ssub.s32 %s15, 1
      %s21 = ssub.s32 %s15, 2
      %s22 = sadd.s32 %s15, 1
      %s23 = ssub.s32 %s15, %s22
      %p24 = scmp.eq.s32.totalorder %s23, 0
      %s26 = sadd.s32 %s25, 1
      %s27 = scalar_select %p24, %s25, %s26
      %p30 = pneg %p24
      %p31 = scmp.eq.s32.totalorder %s15, 1
      %p32 = por %p30, %p31
      %p33 = scmp.ne.s32.totalorder %s25, %s28
      %p34 = scmp.eq.s32.totalorder %s15, 0
      %p35 = por %p33, %p34
      %p36 = scmp.ne.s32.totalorder %s25, %s28
      %p37 = scmp.eq.s32.totalorder %s20, 1
      %p38 = por %p36, %p37
      %p39 = scmp.ne.s32.totalorder %s28, %s29
      %p40 = scmp.eq.s32.totalorder %s20, 0
      %p41 = por %p39, %p40
      %p42 = scmp.ne.s32.totalorder %s28, %s29
      %p43 = scmp.eq.s32.totalorder %s21, 1
      %p44 = por %p42, %p43
      %p46 = scmp.ne.s32.totalorder %s29, %s45
      %p47 = scmp.eq.s32.totalorder %s21, 0
      %p48 = por %p46, %p47
      %s50 = sadd.s32 %s49, 1
      %p53 = scmp.eq.s32.totalorder %s15, 1
      %p54 = scmp.ne.s32.totalorder %s49, %s51
      %p55 = scmp.eq.s32.totalorder %s15, 0
      %p56 = por %p54, %p55
      %p57 = scmp.ne.s32.totalorder %s49, %s51
      %p58 = scmp.eq.s32.totalorder %s20, 1
      %p59 = por %p57, %p58
      %p60 = scmp.ne.s32.totalorder %s51, %s52
      %p61 = scmp.eq.s32.totalorder %s20, 0
      %p62 = por %p60, %p61
      %p63 = scmp.ne.s32.totalorder %s51, %s52
      %p64 = scmp.eq.s32.totalorder %s21, 1
      %p65 = por %p63, %p64
      %p67 = scmp.ne.s32.totalorder %s52, %s66
      %p68 = scmp.eq.s32.totalorder %s21, 0
      %p69 = por %p67, %p68
      %s71 = sadd.s32 %s70, 1
      %p74 = scmp.eq.s32.totalorder %s15, 1
      %p75 = scmp.ne.s32.totalorder %s70, %s72
      %p76 = scmp.eq.s32.totalorder %s15, 0
      %p77 = por %p75, %p76
      %p78 = scmp.ne.s32.totalorder %s70, %s72
      %p79 = scmp.eq.s32.totalorder %s20, 1
      %p80 = por %p78, %p79
      %p81 = scmp.ne.s32.totalorder %s72, %s73
      %p82 = scmp.eq.s32.totalorder %s20, 0
      %p83 = por %p81, %p82
      %p84 = scmp.ne.s32.totalorder %s72, %s73
      %p85 = scmp.eq.s32.totalorder %s21, 1
      %p86 = por %p84, %p85
      %p88 = scmp.ne.s32.totalorder %s73, %s87
      %p89 = scmp.eq.s32.totalorder %s21, 0
      %p90 = por %p88, %p89
      %s92 = sadd.s32 %s91, 1
      %p95 = scmp.eq.s32.totalorder %s15, 1
      %p96 = scmp.ne.s32.totalorder %s91, %s93
      %p97 = scmp.eq.s32.totalorder %s15, 0
      %p98 = por %p96, %p97
      %p99 = scmp.ne.s32.totalorder %s91, %s93
      %p100 = scmp.eq.s32.totalorder %s20, 1
      %p101 = por %p99, %p100
      %p102 = scmp.ne.s32.totalorder %s93, %s94
      %p103 = scmp.eq.s32.totalorder %s20, 0
      %p104 = por %p102, %p103
      %p105 = scmp.ne.s32.totalorder %s93, %s94
      %p106 = scmp.eq.s32.totalorder %s21, 1
      %p107 = por %p105, %p106
      %p109 = scmp.ne.s32.totalorder %s94, %s108
      %p110 = scmp.eq.s32.totalorder %s21, 0
      %p111 = por %p109, %p110
      %s113 = sadd.s32 %s112, 1
      %p116 = scmp.eq.s32.totalorder %s15, 1
      %p117 = scmp.ne.s32.totalorder %s112, %s114
      %p118 = scmp.eq.s32.totalorder %s15, 0
      %p119 = por %p117, %p118
      %p120 = scmp.ne.s32.totalorder %s112, %s114
      %p121 = scmp.eq.s32.totalorder %s20, 1
      %p122 = por %p120, %p121
      %p123 = scmp.ne.s32.totalorder %s114, %s115
      %p124 = scmp.eq.s32.totalorder %s20, 0
      %p125 = por %p123, %p124
      %p126 = scmp.ne.s32.totalorder %s114, %s115
      %p127 = scmp.eq.s32.totalorder %s21, 1
      %p128 = por %p126, %p127
      %p130 = scmp.ne.s32.totalorder %s115, %s129
      %p131 = scmp.eq.s32.totalorder %s21, 0
      %p132 = por %p130, %p131
      %s133 = ssub.s32 %s15, %s22
      %p134 = scmp.eq.s32.totalorder %s133, 0
      %s136 = sadd.s32 %s135, 1
      %s137 = scalar_select %p134, %s135, %s136
      %p140 = pneg %p134
      %p141 = scmp.eq.s32.totalorder %s15, 1
      %p142 = por %p140, %p141
      %p143 = scmp.ne.s32.totalorder %s135, %s138
      %p144 = scmp.eq.s32.totalorder %s15, 0
      %p145 = por %p143, %p144
      %p146 = scmp.ne.s32.totalorder %s135, %s138
      %p147 = scmp.eq.s32.totalorder %s20, 1
      %p148 = por %p146, %p147
      %p149 = scmp.ne.s32.totalorder %s138, %s139
      %p150 = scmp.eq.s32.totalorder %s20, 0
      %p151 = por %p149, %p150
      %p152 = scmp.ne.s32.totalorder %s138, %s139
      %p153 = scmp.eq.s32.totalorder %s21, 1
      %p154 = por %p152, %p153
      %p156 = scmp.ne.s32.totalorder %s139, %s155
      %p157 = scmp.eq.s32.totalorder %s21, 0
      %p158 = por %p156, %p157
      %p159 = scmp.le.s32.totalorder 1, %s15
      %p160 = scmp.lt.s32.totalorder %s15, 3
      %p161 = pnand %p159, %p160
      %p162 = pneg %p161
      // Predicated region
      $region9: #{tpu_custom_call.1} parent=5 // pred_check
        _
      $region10: #{tpu_custom_call.1} parent=5 // pred_check_branch
        %164 = sbr.rel (%p161) target = $region12
      $region11: #{tpu_custom_call.1} parent=5 // pred_region
        %s165 = ssub.s32 %s15, 1
        // Predicated region
        $region13: #{tpu_custom_call.1} parent=11 // pred_check
          %p166 = pneg %p62
        $region14: #{tpu_custom_call.1} parent=11 // pred_check_branch
          %168 = sbr.rel (%p166) target = $region16
        $region15: #{tpu_custom_call.1} parent=11 // pred_region
          _
        $region16: #{tpu_custom_call.1} parent=11 // pred_fallthru
          _
        // Predicated region
        $region17: #{tpu_custom_call.1} parent=11 // pred_check
          %p169 = pneg %p83
        $region18: #{tpu_custom_call.1} parent=11 // pred_check_branch
          %171 = sbr.rel (%p169) target = $region20
        $region19: #{tpu_custom_call.1} parent=11 // pred_region
          _
        $region20: #{tpu_custom_call.1} parent=11 // pred_fallthru
          _
        // Predicated region
        $region21: #{tpu_custom_call.1} parent=11 // pred_check
          %p172 = pneg %p104
        $region22: #{tpu_custom_call.1} parent=11 // pred_check_branch
          %174 = sbr.rel (%p172) target = $region24
        $region23: #{tpu_custom_call.1} parent=11 // pred_region
          _
        $region24: #{tpu_custom_call.1} parent=11 // pred_fallthru
          _
        // Predicated region
        $region25: #{tpu_custom_call.1} parent=11 // pred_check
          %p175 = pneg %p125
        $region26: #{tpu_custom_call.1} parent=11 // pred_check_branch
          %177 = sbr.rel (%p175) target = $region28
        $region27: #{tpu_custom_call.1} parent=11 // pred_region
          _
        $region28: #{tpu_custom_call.1} parent=11 // pred_fallthru
          _
      $region12: #{tpu_custom_call.1} parent=5 // pred_fallthru
        _
      %p178 = scmp.lt.s32.totalorder %s15, 2
      // Predicated region
      $region29: #{tpu_custom_call.1} parent=5 // pred_check
        %p179 = pneg %p178
      $region30: #{tpu_custom_call.1} parent=5 // pred_check_branch
        %181 = sbr.rel (%p179) target = $region32
      $region31: #{tpu_custom_call.1} parent=5 // pred_region
        // Predicated region
        $region33: #{tpu_custom_call.1} parent=31 // pred_check
          %p182 = pneg %p35
        $region34: #{tpu_custom_call.1} parent=31 // pred_check_branch
          %184 = sbr.rel (%p182) target = $region36
        $region35: #{tpu_custom_call.1} parent=31 // pred_region
          %s185 = smul.u32 4, %s15
          %p186 = scmp.lt.s32.totalorder %s185, 7
          %s187 = scalar_select %p186, %s185, 7
          %s188 = smul.addr %s187, 4
          %s189 = scalar_lea.vmem %s0, %s188
          %s190 = smul.u32 4, %s15
        $region36: #{tpu_custom_call.1} parent=31 // pred_fallthru
          _
      $region32: #{tpu_custom_call.1} parent=5 // pred_fallthru
        _
      %p191 = scmp.le.s32.totalorder 1, %s15
      %p192 = scmp.lt.s32.totalorder %s15, 3
      %p193 = pnand %p191, %p192
      %p194 = pneg %p193
      // Predicated region
      $region37: #{tpu_custom_call.1} parent=5 // pred_check
        _
      $region38: #{tpu_custom_call.1} parent=5 // pred_check_branch
        %196 = sbr.rel (%p193) target = $region40
      $region39: #{tpu_custom_call.1} parent=5 // pred_region
        %s197 = ssub.s32 %s15, 1
        %s198 = smul.u32 4, %s20
        %p199 = scmp.lt.s32.totalorder %s198, 7
        %s200 = scalar_select %p199, %s198, 7
        %s201 = smul.addr %s200, 4
        %s202 = scalar_lea.vmem %s0, %s201
        %p203 = pneg %p41
        %p204 = pneg %p38
        %p205 = pneg %p62
        %p206 = pneg %p59
        %p207 = pneg %p83
        %p208 = pneg %p80
        %p209 = pneg %p104
        %p210 = pneg %p101
        %p211 = pneg %p125
        %p212 = pneg %p122
        %p213 = pneg %p151
        %p214 = pneg %p148
        %s215 = sand.u32 %s138, 1
        %s216 = scalar_lea.sflag [#allocation4], %s215
        %s217 = sand.u32 %s138, 1
        %s218 = smul.addr %s217, 4
        %s219 = scalar_lea.vmem [#allocation3], %s218
        %s220 = smul.u32 4, %s20
        %p221 = scmp.lt.s32.totalorder %s220, 7
        %s222 = scalar_select %p221, %s220, 7
        %s223 = smul.addr %s222, 4
        %s224 = scalar_lea.vmem %s0, %s223
        %s225 = smul.u32 4, %s20
        %s226 = smul.u32 4, %s20
        %v227 = vld [vmem:[%s224] sm:$0x77]
        %v228 = vld [vmem:[%s224 + $0x8] sm:$0x77]
        %v229 = vld [vmem:[%s1] sm:$0xff]
        %v230 = vld [vmem:[%s1 + $0x8] sm:$0xff]
        %v231 = vld [vmem:[%s1 + $0x10] sm:$0xff]
        %v232 = vld [vmem:[%s1 + $0x18] sm:$0xff]
        %234 = vset.pattern.permute.xlu0 0
        %235 = vperm.xlu0 %234, %v229
        %v236 = vpop.permute.xlu0 %235
        %239 = vset.pattern.permute.xlu0 0
        %240 = vperm.xlu0 %239, %v230
        %v241 = vpop.permute.xlu0 %240
        %244 = vset.pattern.permute.xlu0 0
        %245 = vperm.xlu0 %244, %v231
        %v246 = vpop.permute.xlu0 %245
        %249 = vset.pattern.permute.xlu0 0
        %250 = vperm.xlu0 %249, %v232
        %v251 = vpop.permute.xlu0 %250
        %v255 = vlaneseq
        %v256 = vshrl.u32 %v255, 7
        %v257 = vsub.s32 0, %v256
        %v258 = vrot.slane %v227, %v257
        %v259 = vlaneseq
        %v260 = vshrl.u32 %v259, 7
        %v261 = vsub.s32 4, %v260
        %v262 = vrot.slane %v227, %v261
        %v263 = vlaneseq
        %v264 = vshrl.u32 %v263, 7
        %v265 = vsub.s32 0, %v264
        %v266 = vrot.slane %v228, %v265
        %v267 = vlaneseq
        %v268 = vshrl.u32 %v267, 7
        %v269 = vsub.s32 4, %v268
        %v270 = vrot.slane %v228, %v269
        %v275 = vlaneseq
        %v276 = vshrl.u32 %v275, 7
        %v277 = vsub.s32 0, %v276
        %v278 = vrot.slane %v258, %v277
        %v279 = vlaneseq
        %v280 = vshrl.u32 %v279, 7
        %v281 = vsub.s32 0, %v280
        %v282 = vrot.slane %v262, %v281
        %v283 = vlaneseq
        %v284 = vshrl.u32 %v283, 7
        %v285 = vsub.s32 0, %v284
        %v286 = vrot.slane %v266, %v285
        %v287 = vlaneseq
        %v288 = vshrl.u32 %v287, 7
        %v289 = vsub.s32 0, %v288
        %v290 = vrot.slane %v270, %v289
        %v291 = vmul.f32 %v236, %v278
        %v292 = vmul.f32 %v236, %v282
        %v293 = vmul.f32 %v236, %v286
        %v294 = vmul.f32 %v236, %v290
        %v295 = vmul.f32 %v241, %v278
        %v296 = vmul.f32 %v241, %v282
        %v297 = vmul.f32 %v241, %v286
        %v298 = vmul.f32 %v241, %v290
        %v299 = vmul.f32 %v246, %v278
        %v300 = vmul.f32 %v246, %v282
        %v301 = vmul.f32 %v246, %v286
        %v302 = vmul.f32 %v246, %v290
        %v303 = vmul.f32 %v251, %v278
        %v304 = vmul.f32 %v251, %v282
        %v305 = vmul.f32 %v251, %v286
        %v306 = vmul.f32 %v251, %v290
        %307 = vset.pattern.permute.xlu0 1
        %308 = vperm.xlu0 %307, %v229
        %v309 = vpop.permute.xlu0 %308
        %311 = vset.pattern.permute.xlu0 1
        %312 = vperm.xlu0 %311, %v230
        %v313 = vpop.permute.xlu0 %312
        %315 = vset.pattern.permute.xlu0 1
        %316 = vperm.xlu0 %315, %v231
        %v317 = vpop.permute.xlu0 %316
        %319 = vset.pattern.permute.xlu0 1
        %320 = vperm.xlu0 %319, %v232
        %v321 = vpop.permute.xlu0 %320
        %v323 = vlaneseq
        %v324 = vshrl.u32 %v323, 7
        %v325 = vsub.s32 1, %v324
        %v326 = vrot.slane %v227, %v325
        %v327 = vlaneseq
        %v328 = vshrl.u32 %v327, 7
        %v329 = vsub.s32 5, %v328
        %v330 = vrot.slane %v227, %v329
        %v331 = vlaneseq
        %v332 = vshrl.u32 %v331, 7
        %v333 = vsub.s32 1, %v332
        %v334 = vrot.slane %v228, %v333
        %v335 = vlaneseq
        %v336 = vshrl.u32 %v335, 7
        %v337 = vsub.s32 5, %v336
        %v338 = vrot.slane %v228, %v337
        %v343 = vlaneseq
        %v344 = vshrl.u32 %v343, 7
        %v345 = vsub.s32 1, %v344
        %v346 = vrot.slane %v326, %v345
        %v347 = vlaneseq
        %v348 = vshrl.u32 %v347, 7
        %v349 = vsub.s32 1, %v348
        %v350 = vrot.slane %v330, %v349
        %v351 = vlaneseq
        %v352 = vshrl.u32 %v351, 7
        %v353 = vsub.s32 1, %v352
        %v354 = vrot.slane %v334, %v353
        %v355 = vlaneseq
        %v356 = vshrl.u32 %v355, 7
        %v357 = vsub.s32 1, %v356
        %v358 = vrot.slane %v338, %v357
        %v359 = vmul.f32 %v309, %v346
        %v360 = vmul.f32 %v309, %v350
        %v361 = vmul.f32 %v309, %v354
        %v362 = vmul.f32 %v309, %v358
        %v363 = vmul.f32 %v313, %v346
        %v364 = vmul.f32 %v313, %v350
        %v365 = vmul.f32 %v313, %v354
        %v366 = vmul.f32 %v313, %v358
        %v367 = vmul.f32 %v317, %v346
        %v368 = vmul.f32 %v317, %v350
        %v369 = vmul.f32 %v317, %v354
        %v370 = vmul.f32 %v317, %v358
        %v371 = vmul.f32 %v321, %v346
        %v372 = vmul.f32 %v321, %v350
        %v373 = vmul.f32 %v321, %v354
        %v374 = vmul.f32 %v321, %v358
        %v375 = vadd.f32 %v291, %v359
        %v376 = vadd.f32 %v292, %v360
        %v377 = vadd.f32 %v293, %v361
        %v378 = vadd.f32 %v294, %v362
        %v379 = vadd.f32 %v295, %v363
        %v380 = vadd.f32 %v296, %v364
        %v381 = vadd.f32 %v297, %v365
        %v382 = vadd.f32 %v298, %v366
        %v383 = vadd.f32 %v299, %v367
        %v384 = vadd.f32 %v300, %v368
        %v385 = vadd.f32 %v301, %v369
        %v386 = vadd.f32 %v302, %v370
        %v387 = vadd.f32 %v303, %v371
        %v388 = vadd.f32 %v304, %v372
        %v389 = vadd.f32 %v305, %v373
        %v390 = vadd.f32 %v306, %v374
        %391 = vset.pattern.permute.xlu0 2
        %392 = vperm.xlu0 %391, %v229
        %v393 = vpop.permute.xlu0 %392
        %395 = vset.pattern.permute.xlu0 2
        %396 = vperm.xlu0 %395, %v230
        %v397 = vpop.permute.xlu0 %396
        %399 = vset.pattern.permute.xlu0 2
        %400 = vperm.xlu0 %399, %v231
        %v401 = vpop.permute.xlu0 %400
        %403 = vset.pattern.permute.xlu0 2
        %404 = vperm.xlu0 %403, %v232
        %v405 = vpop.permute.xlu0 %404
        %v407 = vlaneseq
        %v408 = vshrl.u32 %v407, 7
        %v409 = vsub.s32 2, %v408
        %v410 = vrot.slane %v227, %v409
        %v411 = vlaneseq
        %v412 = vshrl.u32 %v411, 7
        %v413 = vsub.s32 6, %v412
        %v414 = vrot.slane %v227, %v413
        %v415 = vlaneseq
        %v416 = vshrl.u32 %v415, 7
        %v417 = vsub.s32 2, %v416
        %v418 = vrot.slane %v228, %v417
        %v419 = vlaneseq
        %v420 = vshrl.u32 %v419, 7
        %v421 = vsub.s32 6, %v420
        %v422 = vrot.slane %v228, %v421
        %v427 = vlaneseq
        %v428 = vshrl.u32 %v427, 7
        %v429 = vsub.s32 2, %v428
        %v430 = vrot.slane %v410, %v429
        %v431 = vlaneseq
        %v432 = vshrl.u32 %v431, 7
        %v433 = vsub.s32 2, %v432
        %v434 = vrot.slane %v414, %v433
        %v435 = vlaneseq
        %v436 = vshrl.u32 %v435, 7
        %v437 = vsub.s32 2, %v436
        %v438 = vrot.slane %v418, %v437
        %v439 = vlaneseq
        %v440 = vshrl.u32 %v439, 7
        %v441 = vsub.s32 2, %v440
        %v442 = vrot.slane %v422, %v441
        %v443 = vmul.f32 %v393, %v430
        %v444 = vmul.f32 %v393, %v434
        %v445 = vmul.f32 %v393, %v438
        %v446 = vmul.f32 %v393, %v442
        %v447 = vmul.f32 %v397, %v430
        %v448 = vmul.f32 %v397, %v434
        %v449 = vmul.f32 %v397, %v438
        %v450 = vmul.f32 %v397, %v442
        %v451 = vmul.f32 %v401, %v430
        %v452 = vmul.f32 %v401, %v434
        %v453 = vmul.f32 %v401, %v438
        %v454 = vmul.f32 %v401, %v442
        %v455 = vmul.f32 %v405, %v430
        %v456 = vmul.f32 %v405, %v434
        %v457 = vmul.f32 %v405, %v438
        %v458 = vmul.f32 %v405, %v442
        %v459 = vadd.f32 %v375, %v443
        %v460 = vadd.f32 %v376, %v444
        %v461 = vadd.f32 %v377, %v445
        %v462 = vadd.f32 %v378, %v446
        %v463 = vadd.f32 %v379, %v447
        %v464 = vadd.f32 %v380, %v448
        %v465 = vadd.f32 %v381, %v449
        %v466 = vadd.f32 %v382, %v450
        %v467 = vadd.f32 %v383, %v451
        %v468 = vadd.f32 %v384, %v452
        %v469 = vadd.f32 %v385, %v453
        %v470 = vadd.f32 %v386, %v454
        %v471 = vadd.f32 %v387, %v455
        %v472 = vadd.f32 %v388, %v456
        %v473 = vadd.f32 %v389, %v457
        %v474 = vadd.f32 %v390, %v458
        %v475 = vld [vmem:[%s2] sm:$0xff]
        %v476 = vld [vmem:[%s2 + $0x8] sm:$0xff]
        %v477 = vld [vmem:[%s2 + $0x10] sm:$0xff]
        %v478 = vld [vmem:[%s2 + $0x18] sm:$0xff]
        %480 = vset.pattern.permute.xlu0 0
        %481 = vperm.xlu0 %480, %v475
        %v482 = vpop.permute.xlu0 %481
        %485 = vset.pattern.permute.xlu0 0
        %486 = vperm.xlu0 %485, %v476
        %v487 = vpop.permute.xlu0 %486
        %490 = vset.pattern.permute.xlu0 0
        %491 = vperm.xlu0 %490, %v477
        %v492 = vpop.permute.xlu0 %491
        %495 = vset.pattern.permute.xlu0 0
        %496 = vperm.xlu0 %495, %v478
        %v497 = vpop.permute.xlu0 %496
        %v499 = vadd.f32 %v459, %v482
        %v500 = vadd.f32 %v460, %v482
        %v501 = vadd.f32 %v461, %v482
        %v502 = vadd.f32 %v462, %v482
        %v503 = vadd.f32 %v463, %v487
        %v504 = vadd.f32 %v464, %v487
        %v505 = vadd.f32 %v465, %v487
        %v506 = vadd.f32 %v466, %v487
        %v507 = vadd.f32 %v467, %v492
        %v508 = vadd.f32 %v468, %v492
        %v509 = vadd.f32 %v469, %v492
        %v510 = vadd.f32 %v470, %v492
        %v511 = vadd.f32 %v471, %v497
        %v512 = vadd.f32 %v472, %v497
        %v513 = vadd.f32 %v473, %v497
        %v514 = vadd.f32 %v474, %v497
        %v515 = vmul.f32 %v499, 0.5
        %v516 = vmul.f32 %v500, 0.5
        %v517 = vmul.f32 %v501, 0.5
        %v518 = vmul.f32 %v502, 0.5
        %v519 = vmul.f32 %v503, 0.5
        %v520 = vmul.f32 %v504, 0.5
        %v521 = vmul.f32 %v505, 0.5
        %v522 = vmul.f32 %v506, 0.5
        %v523 = vmul.f32 %v507, 0.5
        %v524 = vmul.f32 %v508, 0.5
        %v525 = vmul.f32 %v509, 0.5
        %v526 = vmul.f32 %v510, 0.5
        %v527 = vmul.f32 %v511, 0.5
        %v528 = vmul.f32 %v512, 0.5
        %v529 = vmul.f32 %v513, 0.5
        %v530 = vmul.f32 %v514, 0.5
        %v531 = vtanh.pop %v515
        %v532 = vtanh.pop %v516
        %v533 = vtanh.pop %v517
        %v534 = vtanh.pop %v518
        %v535 = vtanh.pop %v519
        %v536 = vtanh.pop %v520
        %v537 = vtanh.pop %v521
        %v538 = vtanh.pop %v522
        %v539 = vtanh.pop %v523
        %v540 = vtanh.pop %v524
        %v541 = vtanh.pop %v525
        %v542 = vtanh.pop %v526
        %v543 = vtanh.pop %v527
        %v544 = vtanh.pop %v528
        %v545 = vtanh.pop %v529
        %v546 = vtanh.pop %v530
        %v547 = vmul.f32 %v531, 0.5
        %v548 = vmul.f32 %v532, 0.5
        %v549 = vmul.f32 %v533, 0.5
        %v550 = vmul.f32 %v534, 0.5
        %v551 = vmul.f32 %v535, 0.5
        %v552 = vmul.f32 %v536, 0.5
        %v553 = vmul.f32 %v537, 0.5
        %v554 = vmul.f32 %v538, 0.5
        %v555 = vmul.f32 %v539, 0.5
        %v556 = vmul.f32 %v540, 0.5
        %v557 = vmul.f32 %v541, 0.5
        %v558 = vmul.f32 %v542, 0.5
        %v559 = vmul.f32 %v543, 0.5
        %v560 = vmul.f32 %v544, 0.5
        %v561 = vmul.f32 %v545, 0.5
        %v562 = vmul.f32 %v546, 0.5
        %v563 = vadd.f32 %v547, 0.5
        %v564 = vadd.f32 %v548, 0.5
        %v565 = vadd.f32 %v549, 0.5
        %v566 = vadd.f32 %v550, 0.5
        %v567 = vadd.f32 %v551, 0.5
        %v568 = vadd.f32 %v552, 0.5
        %v569 = vadd.f32 %v553, 0.5
        %v570 = vadd.f32 %v554, 0.5
        %v571 = vadd.f32 %v555, 0.5
        %v572 = vadd.f32 %v556, 0.5
        %v573 = vadd.f32 %v557, 0.5
        %v574 = vadd.f32 %v558, 0.5
        %v575 = vadd.f32 %v559, 0.5
        %v576 = vadd.f32 %v560, 0.5
        %v577 = vadd.f32 %v561, 0.5
        %v578 = vadd.f32 %v562, 0.5
        %v579 = vld [vmem:[%s3] sm:$0xff]
        %v580 = vld [vmem:[%s3 + $0x8] sm:$0xff]
        %v581 = vld [vmem:[%s3 + $0x10] sm:$0xff]
        %v582 = vld [vmem:[%s3 + $0x18] sm:$0xff]
        %584 = vset.pattern.permute.xlu0 0
        %585 = vperm.xlu0 %584, %v579
        %v586 = vpop.permute.xlu0 %585
        %589 = vset.pattern.permute.xlu0 0
        %590 = vperm.xlu0 %589, %v580
        %v591 = vpop.permute.xlu0 %590
        %594 = vset.pattern.permute.xlu0 0
        %595 = vperm.xlu0 %594, %v581
        %v596 = vpop.permute.xlu0 %595
        %599 = vset.pattern.permute.xlu0 0
        %600 = vperm.xlu0 %599, %v582
        %v601 = vpop.permute.xlu0 %600
        %v603 = vmul.f32 %v563, %v586
        %v604 = vmul.f32 %v564, %v586
        %v605 = vmul.f32 %v565, %v586
        %v606 = vmul.f32 %v566, %v586
        %v607 = vmul.f32 %v567, %v591
        %v608 = vmul.f32 %v568, %v591
        %v609 = vmul.f32 %v569, %v591
        %v610 = vmul.f32 %v570, %v591
        %v611 = vmul.f32 %v571, %v596
        %v612 = vmul.f32 %v572, %v596
        %v613 = vmul.f32 %v573, %v596
        %v614 = vmul.f32 %v574, %v596
        %v615 = vmul.f32 %v575, %v601
        %v616 = vmul.f32 %v576, %v601
        %v617 = vmul.f32 %v577, %v601
        %v618 = vmul.f32 %v578, %v601
        %v619 = vadd.f32 %v603, %v607
        %v620 = vadd.f32 %v619, %v611
        %v621 = vadd.f32 %v620, %v615
        %v622 = vrot.slane %v621, 4
        %v623 = vadd.f32 %v621, %v622
        %v624 = vrot.slane %v623, 2
        %v625 = vadd.f32 %v623, %v624
        %v626 = vrot.slane %v625, 1
        %v627 = vadd.f32 %v625, %v626
        %v628 = vadd.f32 %v604, %v608
        %v629 = vadd.f32 %v628, %v612
        %v630 = vadd.f32 %v629, %v616
        %v631 = vrot.slane %v630, 4
        %v632 = vadd.f32 %v630, %v631
        %v633 = vrot.slane %v632, 2
        %v634 = vadd.f32 %v632, %v633
        %v635 = vrot.slane %v634, 1
        %v636 = vadd.f32 %v634, %v635
        %v637 = vadd.f32 %v605, %v609
        %v638 = vadd.f32 %v637, %v613
        %v639 = vadd.f32 %v638, %v617
        %v640 = vrot.slane %v639, 4
        %v641 = vadd.f32 %v639, %v640
        %v642 = vrot.slane %v641, 2
        %v643 = vadd.f32 %v641, %v642
        %v644 = vrot.slane %v643, 1
        %v645 = vadd.f32 %v643, %v644
        %v646 = vadd.f32 %v606, %v610
        %v647 = vadd.f32 %v646, %v614
        %v648 = vadd.f32 %v647, %v618
        %v649 = vrot.slane %v648, 4
        %v650 = vadd.f32 %v648, %v649
        %v651 = vrot.slane %v650, 2
        %v652 = vadd.f32 %v650, %v651
        %v653 = vrot.slane %v652, 1
        %v654 = vadd.f32 %v652, %v653
        %s655 = sld [smem:[#allocation2]]
        %v656 = vstv %s655
        %v657 = vadd.f32 %v627, %v656
        %v658 = vadd.f32 %v636, %v656
        %v659 = vadd.f32 %v645, %v656
        %v660 = vadd.f32 %v654, %v656
        %v665 = vcombine.low %v657, %v658
        %v666 = vcombine.low %v659, %v660
        %v668 = vunpack.c.l.s4 1966171168
        %v669 = vunpack.c.0.s8 %v668
        %v670 = vlaneseq
        %v671 = vshrl.u32 %v670, 7
        %v672 = vsub.s32 %v669, %v671
        %v673 = vrot.slane %v665, %v672
        %v675 = vunpack.c.l.s4 1966171168
        %v676 = vunpack.c.0.s8 %v675
        %v677 = vlaneseq
        %v678 = vshrl.u32 %v677, 7
        %v679 = vsub.s32 %v676, %v678
        %v680 = vrot.slane %v666, %v679
        %v681 = vcombine.low %v673, %v680
        %v683 = vunpack.c.l.s4 1966171168
        %v684 = vunpack.c.0.s8 %v683
        %v685 = vlaneseq
        %v686 = vshrl.u32 %v685, 7
        %v687 = vsub.s32 %v684, %v686
        %v688 = vrot.slane %v681, %v687
        %v690 = vlaneseq
        %vm691 = vcmp.ge.s32.totalorder %v690, 0
        %vm692 = vcmp.lt.s32.totalorder %v690, 512
        %vm693 = vmand %vm691, %vm692
        %694 = vst.msk [vmem:[%s219] sm:$0xf] %vm693, %v688
        %s695 = sand.u32 %s138, 1
        %s696 = scalar_lea.sflag [#allocation4], %s695
        %s697 = sand.u32 %s138, 1
        %s698 = smul.addr %s697, 4
        %s699 = scalar_lea.vmem [#allocation3], %s698
        // Predicated region
        $region41: #{tpu_custom_call.1} parent=39 // pred_check
          %p700 = pneg %p148
        $region42: #{tpu_custom_call.1} parent=39 // pred_check_branch
          %702 = sbr.rel (%p700) target = $region44
        $region43: #{tpu_custom_call.1} parent=39 // pred_region
          %s703 = smul.u32 4, %s20
          %s705 = ssub.s32 64, 64
          %706 = vsyncadd %s696, %s705
          %s707 = smul.addr %s703, 16
          %s708 = scalar_lea.hbm %s5, %s707
          %s710 = sshll.u32 %s699, 4
          %s711 = int_to_ptr.vmem [resolvable:$true] %s710
          %713 = dma.vmem_to_hbm [thread:$0]  %s711, 64, %s708, %s696
        $region44: #{tpu_custom_call.1} parent=39 // pred_fallthru
          _
      $region40: #{tpu_custom_call.1} parent=5 // pred_fallthru
        _
      %p714 = scmp.le.s32.totalorder 2, %s15
      // Predicated region
      $region45: #{tpu_custom_call.1} parent=5 // pred_check
        %p715 = pneg %p714
      $region46: #{tpu_custom_call.1} parent=5 // pred_check_branch
        %717 = sbr.rel (%p715) target = $region48
      $region47: #{tpu_custom_call.1} parent=5 // pred_region
        %s718 = ssub.s32 %s15, 2
        // Predicated region
        $region49: #{tpu_custom_call.1} parent=47 // pred_check
          %p719 = pneg %p154
        $region50: #{tpu_custom_call.1} parent=47 // pred_check_branch
          %721 = sbr.rel (%p719) target = $region52
        $region51: #{tpu_custom_call.1} parent=47 // pred_region
          %s722 = sand.u32 %s139, 1
          %s723 = scalar_lea.sflag [#allocation4], %s722
          %s724 = sand.u32 %s139, 1
          %s725 = smul.addr %s724, 4
          %s726 = scalar_lea.vmem [#allocation3], %s725
          %727 = dma.done %s723, 64
        $region52: #{tpu_custom_call.1} parent=47 // pred_fallthru
          _
      $region48: #{tpu_custom_call.1} parent=5 // pred_fallthru
        _
    $region6: #{tpu_custom_call.1} parent=1 // loop_footer
      %s19 = sadd.s32 1, %s15
    $region7: #{tpu_custom_call.1} parent=1 // loop_footer_branch
      %14 = sbr.rel target = $region3
    $region8: #{tpu_custom_call.1} parent=1 // loop_exit
      _
    %728 = vsyncpa [#allocation4], 1
    %s729 = scalar_lea.sflag [#allocation4], 1
    %730 = vsyncpa %s729, 1

</llo_original>
